<compile_context>
chip_gen: v7x
topology: tpu7x:2x2x1
jax: 0.10.0
libtpu: 0.0.40
codegen_flags: <defaults>
</compile_context>

<pallas_src>
import functools

import jax
import jax.numpy as jnp
from jax.experimental import pallas as pl
from jax.experimental.pallas import tpu as pltpu

_HIDDEN = 64
_FALLBACK_VMEM_LIMIT = 32 * 1024 * 1024


@functools.lru_cache(maxsize=1)
def _vmem_limit_bytes():
    """Per-chip scoped-VMEM budget: ~96 MiB on v5e/v6e (128 MiB physical),
    ~48 MiB on v7x (64 MiB physical per TC), 32 MiB fallback."""
    try:
        cap = int(pltpu.get_tpu_info().vmem_capacity_bytes)
        return min(int(cap * 0.75), 100 * 1024 * 1024)
    except Exception:  # query unavailable -> conservative default
        return _FALLBACK_VMEM_LIMIT


def _choose_tile(batch, in_features, x_itemsize, vmem_limit, max_tile=None):
    """Largest batch tile whose (double-buffered) blocks fit the VMEM budget."""
    budget = int(0.75 * vmem_limit)

    def vmem_need(tm):
        x_bufs = 2 * tm * in_features * x_itemsize          # double-buffered x tiles
        o_bufs = 2 * tm * 4                                  # double-buffered (tm,1) out
        # Resident weights may still be double-buffered by the pipeliner.
        w_bufs = 2 * (in_features * _HIDDEN * x_itemsize     # w1
                      + _HIDDEN * 4                          # b1
                      + _HIDDEN * 4                          # w2 column
                      + 4)                                    # b2
        h_live = tm * _HIDDEN * 4                             # fc1 activations (f32)
        return x_bufs + o_bufs + w_bufs + h_live

    tm = 8192 if max_tile is None else max_tile
    while tm > 128 and vmem_need(tm) > budget:
        tm //= 2

    if batch <= tm:
        # Single tile: block == full array, so no (8,128)/(16,128) alignment
        # requirement and no ragged block.
        return batch, 1

    # Multi-tile: tile must be a multiple of 128 (sublane/lane alignment for
    # both the (tm, D) input block and the (tm, 1) output block).
    tm = max(128, (tm // 128) * 128)
    num_tiles = (batch + tm - 1) // tm
    return tm, num_tiles


def _mlp_kernel(x_ref, w1_ref, b1_ref, w2_ref, b2_ref, o_ref):
    # fc1 on the MXU: [TM, D] @ [D, 64] -> f32 [TM, 64] (f32 accumulation even
    # when x/w1 arrive as bf16).
    h = jnp.dot(x_ref[...], w1_ref[...], preferred_element_type=jnp.float32)
    h = h + b1_ref[...]                      # (1, 64) broadcast over sublanes
    # Dropout(0.2) is identity at inference time (module.eval()).
    # TODO(synk): training-mode dropout would use pltpu.prng_seed/prng_random_bits + mask.
    h = jnp.maximum(h, 0.0)                  # ReLU (VPU)

    # fc2 as an MXU matvec: [TM, 64] @ [64, 1] -> [TM, 1].  No transpose of the
    # full h tile (avoids a potential [TM,64] XLU transpose); the (TM,1)
    # masked stores are tiny relative to the x-tile DMA that dominates.
    y = jnp.dot(h, w2_ref[...], preferred_element_type=jnp.float32)
    o_ref[...] = jax.nn.sigmoid(y + b2_ref[0, 0])   # scalar bias from SMEM; EUP sigmoid


def classification_model_forward(x, w1, b1, w2, b2, *, max_tile=None):
    """x: [B, D] (f32 or bf16-resident); w1: [D,64]; b1: [1,64]; w2: [1,64]; b2: [1,1] -> [B,1] f32."""
    B, D = x.shape
    assert w1.shape == (D, _HIDDEN) and b1.shape == (1, _HIDDEN)
    assert w2.shape == (1, _HIDDEN) and b2.shape == (1, 1)

    # bf16 fast path only when x is ALREADY bf16 in HBM: never cast x here (a
    # wrapper-side astype is a full extra HBM round trip on an HBM-bound
    # kernel).  Only the tiny w1 is cast to match.
    if x.dtype == jnp.bfloat16:
        w1 = w1.astype(jnp.bfloat16)

    vmem_limit = _vmem_limit_bytes()
    tm, num_tiles = _choose_tile(B, D, x.dtype.itemsize, vmem_limit, max_tile)

    # Ragged last block (when B % tm != 0): Pallas reads garbage rows past B
    # and drops writes past B.  All math is row-wise, so those rows never
    # influence valid outputs.  Do NOT add any cross-row reduction here without
    # masking the tail rows first.
    out = pl.pallas_call(
        _mlp_kernel,
        out_shape=jax.ShapeDtypeStruct((B, 1), jnp.float32),
        grid_spec=pltpu.PrefetchScalarGridSpec(
            num_scalar_prefetch=0,
            grid=(num_tiles,),
            in_specs=[
                pl.BlockSpec((tm, D), lambda i: (i, 0)),             # x batch tile
                pl.BlockSpec((D, _HIDDEN), lambda i: (0, 0)),        # w1 (resident)
                pl.BlockSpec((1, _HIDDEN), lambda i: (0, 0)),        # b1 (resident)
                pl.BlockSpec((_HIDDEN, 1), lambda i: (0, 0)),        # w2 column (resident)
                pl.BlockSpec(memory_space=pltpu.MemorySpace.SMEM),   # b2 scalar
            ],
            out_specs=pl.BlockSpec((tm, 1), lambda i: (i, 0)),
        ),
        compiler_params=pltpu.CompilerParams(
            # Batch tiles are independent -> shard across TCs where supported.
            # If a v7x profile shows one TC idle, switch to pltpu.CORE_PARALLEL.
            dimension_semantics=("parallel",),
            vmem_limit_bytes=vmem_limit,
        ),
    )(x, w1, b1, w2.reshape(_HIDDEN, 1), b2)

    return out


def init_params(key, input_size, hidden=_HIDDEN):
    """PyTorch-default U(-1/sqrt(fan_in), 1/sqrt(fan_in)) init, pre-transposed layout."""
    k1, k2, k3, k4 = jax.random.split(key, 4)
    bound1 = 1.0 / jnp.sqrt(float(input_size))
    bound2 = 1.0 / jnp.sqrt(float(hidden))
    w1 = jax.random.uniform(k1, (input_size, hidden), jnp.float32, -bound1, bound1)
    b1 = jax.random.uniform(k2, (1, hidden), jnp.float32, -bound1, bound1)
    w2 = jax.random.uniform(k3, (1, hidden), jnp.float32, -bound2, bound2)
    b2 = jax.random.uniform(k4, (1, 1), jnp.float32, -bound2, bound2)
    return w1, b1, w2, b2


def _reference(x, w1, b1, w2, b2):
    return jax.nn.sigmoid(jnp.maximum(x @ w1 + b1, 0.0) @ w2.T + b2)


if __name__ == "__main__":
    key = jax.random.PRNGKey(0)

    # --- Case 1: small shape matching the module spec (single tile, f32) ---
    k_x, k_p = jax.random.split(key)
    batch, input_size = 8, 32
    x = jax.random.normal(k_x, (batch, input_size), jnp.float32)
    params = init_params(k_p, input_size)

    out = jax.block_until_ready(classification_model_forward(x, *params))
    ref = _reference(x, *params)
    assert out.shape == (batch, 1)
    assert jnp.allclose(out, ref, atol=1e-5), "case1 (small, f32) mismatch vs JAX reference"

    # --- Case 2: multi-tile grid with a ragged last block (no padding), f32 ---
    # max_tile=256 forces the multi-tile path at a small size: 700 = 2*256 + 188.
    k_x2, k_p2 = jax.random.split(jax.random.fold_in(key, 1))
    B2, D2 = 700, 128
    x2 = jax.random.normal(k_x2, (B2, D2), jnp.float32)
    params2 = init_params(k_p2, D2)
    out2 = jax.block_until_ready(
        classification_model_forward(x2, *params2, max_tile=256))
    ref2 = _reference(x2, *params2)
    assert out2.shape == (B2, 1)
    assert jnp.allclose(out2, ref2, atol=1e-3), "case2 (multi-tile, ragged, f32) mismatch"

    # --- Case 3: bf16-resident x (upstream already produced bf16), multi-tile ---
    x2_bf16 = x2.astype(jnp.bfloat16)   # simulates x living in HBM as bf16
    out3 = jax.block_until_ready(
        classification_model_forward(x2_bf16, *params2, max_tile=256))
    assert out3.shape == (B2, 1)
    assert jnp.allclose(out3, ref2, atol=2e-2), "case3 (multi-tile, bf16) mismatch"

    print("KERNEL_OK")
</pallas_src>

<mosaic_0001>
module attributes {stable_mosaic.version = 11 : i64} {
  func.func @_mlp_kernel(%arg0: i32, %arg1: memref<8x32xf32, #tpu.memory_space<vmem>>, %arg2: memref<32x64xf32, #tpu.memory_space<vmem>>, %arg3: memref<1x64xf32, #tpu.memory_space<vmem>>, %arg4: memref<64x1xf32, #tpu.memory_space<vmem>>, %arg5: memref<1x1xf32, #tpu.memory_space<smem>>, %arg6: memref<8x1xf32, #tpu.memory_space<vmem>>) attributes {dimension_semantics = [#tpu.dimension_semantics<parallel>], iteration_bounds = array<i64: 1>, scalar_prefetch = 0 : i64, scratch_operands = 0 : i64, tpu.core_type = #tpu.core_type<tc>, window_params = [{transform_indices = @transform_0, window_bounds = array<i64: 8, 32>}, {pipeline_mode = #tpu.pipeline_mode<synchronous>, transform_indices = @transform_1, window_bounds = array<i64: 32, 64>}, {pipeline_mode = #tpu.pipeline_mode<synchronous>, transform_indices = @transform_2, window_bounds = array<i64: 1, 64>}, {pipeline_mode = #tpu.pipeline_mode<synchronous>, transform_indices = @transform_3, window_bounds = array<i64: 64, 1>}, {transform_indices = @transform_4, window_bounds = array<i64: 1, 1>}, {transform_indices = @transform_5, window_bounds = array<i64: 8, 1>}]} {
    %c0 = arith.constant 0 : index
    %c0_0 = arith.constant 0 : index
    %0 = vector.load %arg1[%c0, %c0_0] : memref<8x32xf32, #tpu.memory_space<vmem>>, vector<8x32xf32>
    %c0_1 = arith.constant 0 : index
    %c0_2 = arith.constant 0 : index
    %1 = vector.load %arg2[%c0_1, %c0_2] : memref<32x64xf32, #tpu.memory_space<vmem>>, vector<32x64xf32>
    %cst = arith.constant dense<0.000000e+00> : vector<8x64xf32>
    %2 = tpu.matmul %0, %1, %cst {dimension_numbers = #tpu.dot_dimension_numbers<[1], [0], [0], [1], [0, 0, 1, 1], [], []>} : vector<8x32xf32>, vector<32x64xf32>, vector<8x64xf32> -> vector<8x64xf32>
    %c0_3 = arith.constant 0 : index
    %c0_4 = arith.constant 0 : index
    %3 = vector.load %arg3[%c0_3, %c0_4] : memref<1x64xf32, #tpu.memory_space<vmem>>, vector<1x64xf32>
    %4 = vector.broadcast %3 : vector<1x64xf32> to vector<8x64xf32>
    %5 = arith.addf %2, %4 : vector<8x64xf32>
    %cst_5 = arith.constant 0.000000e+00 : f32
    %6 = vector.broadcast %cst_5 : f32 to vector<8x64xf32>
    %7 = arith.maximumf %5, %6 : vector<8x64xf32>
    %c0_6 = arith.constant 0 : index
    %c0_7 = arith.constant 0 : index
    %8 = vector.load %arg4[%c0_6, %c0_7] : memref<64x1xf32, #tpu.memory_space<vmem>>, vector<64x1xf32>
    %cst_8 = arith.constant dense<0.000000e+00> : vector<8x1xf32>
    %9 = tpu.matmul %7, %8, %cst_8 {dimension_numbers = #tpu.dot_dimension_numbers<[1], [0], [0], [1], [0, 0, 1, 1], [], []>} : vector<8x64xf32>, vector<64x1xf32>, vector<8x1xf32> -> vector<8x1xf32>
    %c0_9 = arith.constant 0 : index
    %c0_10 = arith.constant 0 : index
    %10 = memref.load %arg5[%c0_9, %c0_10] : memref<1x1xf32, #tpu.memory_space<smem>>
    %11 = vector.broadcast %10 : f32 to vector<8x1xf32>
    %12 = arith.addf %9, %11 : vector<8x1xf32>
    %13 = arith.negf %12 : vector<8x1xf32>
    %14 = math.exp %13 : vector<8x1xf32>
    %cst_11 = arith.constant 1.000000e+00 : f32
    %15 = vector.broadcast %cst_11 : f32 to vector<8x1xf32>
    %16 = arith.addf %15, %14 : vector<8x1xf32>
    %17 = arith.divf %15, %16 : vector<8x1xf32>
    %c0_12 = arith.constant 0 : index
    %c0_13 = arith.constant 0 : index
    %18 = vector.load %arg6[%c0_12, %c0_13] : memref<8x1xf32, #tpu.memory_space<vmem>>, vector<8x1xf32>
    tpu.vector_store %arg6[%c0_12, %c0_13], %17 {strides = array<i32>} : memref<8x1xf32, #tpu.memory_space<vmem>>, vector<8x1xf32>,
    return
  }
  func.func @transform_0(%arg0: i32) -> (i32, i32) {
    %c0_i32 = arith.constant 0 : i32
    %c0_i32_0 = arith.constant 0 : i32
    return %arg0, %c0_i32 : i32, i32
  }
  func.func @transform_1(%arg0: i32) -> (i32, i32) {
    %c0_i32 = arith.constant 0 : i32
    %c0_i32_0 = arith.constant 0 : i32
    %c0_i32_1 = arith.constant 0 : i32
    return %c0_i32, %c0_i32_0 : i32, i32
  }
  func.func @transform_2(%arg0: i32) -> (i32, i32) {
    %c0_i32 = arith.constant 0 : i32
    %c0_i32_0 = arith.constant 0 : i32
    %c0_i32_1 = arith.constant 0 : i32
    return %c0_i32, %c0_i32_0 : i32, i32
  }
  func.func @transform_3(%arg0: i32) -> (i32, i32) {
    %c0_i32 = arith.constant 0 : i32
    %c0_i32_0 = arith.constant 0 : i32
    %c0_i32_1 = arith.constant 0 : i32
    return %c0_i32, %c0_i32_0 : i32, i32
  }
  func.func @transform_4(%arg0: i32) -> (i32, i32) {
    %c0_i32 = arith.constant 0 : i32
    %c0_i32_0 = arith.constant 0 : i32
    %c0_i32_1 = arith.constant 0 : i32
    return %c0_i32, %c0_i32_0 : i32, i32
  }
  func.func @transform_5(%arg0: i32) -> (i32, i32) {
    %c0_i32 = arith.constant 0 : i32
    %c0_i32_0 = arith.constant 0 : i32
    return %arg0, %c0_i32 : i32, i32
  }
}

</mosaic_0001>

<llo_original>
// kernel: tpu_custom_call.1
$region0: #{tpu_custom_call.1}
  #allocation0 [shape = 'u32[]', space=smem, size = 0x4, offset = 0x4, fixed_abs, tag = 'smem constant byte address 0x4 - core index']
  #allocation1 [shape = 'u32[144,128]{1,0:T(1,128)}', space=vmem, size = 0x12000, scoped, tag = 'internal scratch']
  #allocation2 [shape = 'f32[1,1]{1,0:T(1,128)S(6)}', space=smem, size = 0x200, scoped, tag = 'scoped memory for tpu_custom_call.1']
  %s0 = inlined_call_operand.vmem [shape: f32[8,32], index: 0, kind: input, shape index: {}]
  %s1 = inlined_call_operand.vmem [shape: f32[32,64], index: 1, kind: input, shape index: {}]
  %s2 = inlined_call_operand.vmem [shape: f32[1,64], index: 2, kind: input, shape index: {}]
  %s3 = inlined_call_operand.vmem [shape: f32[64,1], index: 3, kind: input, shape index: {}]
  %s4 = inlined_call_operand.<no memory space> [shape: f32[1,1], index: 4, kind: input, shape index: {}]
  %s5 = inlined_call_operand.vmem [shape: f32[8,1], index: 5, kind: output, shape index: {}]
  %s6 = sld [smem:[#allocation0]]
  $region30: #{tpu_custom_call.1} parent=0
    _
  %s8 = ssub.s32 1, %s6
  %s9 = scalar_select 0, %s8, %s6
  %10 = sst [smem:[#allocation2]] %s4
  // Predicated region
  $region2: #{tpu_custom_call.1} parent=0 // pred_check
    _
  $region3: #{tpu_custom_call.1} parent=0 // pred_check_branch
    %12 = sbr.rel (0) target = $region5
  $region4: #{tpu_custom_call.1} parent=0 // pred_region
    _
  $region5: #{tpu_custom_call.1} parent=0 // pred_fallthru
    _
  // Predicated region
  $region6: #{tpu_custom_call.1} parent=0 // pred_check
    _
  $region7: #{tpu_custom_call.1} parent=0 // pred_check_branch
    %14 = sbr.rel (0) target = $region9
  $region8: #{tpu_custom_call.1} parent=0 // pred_region
    _
  $region9: #{tpu_custom_call.1} parent=0 // pred_fallthru
    _
  // Predicated region
  $region10: #{tpu_custom_call.1} parent=0 // pred_check
    _
  $region11: #{tpu_custom_call.1} parent=0 // pred_check_branch
    %16 = sbr.rel (0) target = $region13
  $region12: #{tpu_custom_call.1} parent=0 // pred_region
    _
  $region13: #{tpu_custom_call.1} parent=0 // pred_fallthru
    _
  // Predicated region
  $region14: #{tpu_custom_call.1} parent=0 // pred_check
    _
  $region15: #{tpu_custom_call.1} parent=0 // pred_check_branch
    %18 = sbr.rel (0) target = $region17
  $region16: #{tpu_custom_call.1} parent=0 // pred_region
    _
  $region17: #{tpu_custom_call.1} parent=0 // pred_fallthru
    _
  // Predicated region
  $region18: #{tpu_custom_call.1} parent=0 // pred_check
    _
  $region19: #{tpu_custom_call.1} parent=0 // pred_check_branch
    %20 = sbr.rel (0) target = $region21
  $region20: #{tpu_custom_call.1} parent=0 // pred_region
    _
  $region21: #{tpu_custom_call.1} parent=0 // pred_fallthru
    _
  %v21 = vld [vmem:[%s0] sm:$0xff]
  %v22 = vld [vmem:[%s1] sm:$0xff]
  %v23 = vld [vmem:[%s1 + $0x8] sm:$0xff]
  %v24 = vld [vmem:[%s1 + $0x10] sm:$0xff]
  %v25 = vld [vmem:[%s1 + $0x18] sm:$0xff]
  %v26 = vld [vmem:[%s2] sm:$0x1]
  %v28 = vlaneseq
  %v29 = vshrl.u32 %v28, 7
  %v30 = vsub.s32 0, %v29
  %v31 = vrot.slane %v26, %v30
  %vm33 = vcmask 261120
  %v35 = vsel %vm33, %v21, 0
  %37 = vmatprep.subr.mxu0 0.0
  %38 = vmatpush1.msra.mxu0 %v22
  %39 = vmatprep.subr.mxu0 0.0
  %40 = vmatpush1.msra.mxu0 %v23
  %41 = vmatprep.subr.mxu0 0.0
  %42 = vmatpush1.msra.mxu0 %v24
  %43 = vmatprep.subr.mxu0 0.0
  %44 = vmatpush1.msra.mxu0 %v25
  %45 = vmatprep.subr.mxu0 0.0
  %46 = vmatpush1.msra.mxu0 0.0
  %47 = vmatprep.subr.mxu0 0.0
  %48 = vmatpush1.msra.mxu0 0.0
  %49 = vmatprep.subr.mxu0 0.0
  %50 = vmatpush1.msra.mxu0 0.0
  %51 = vmatprep.subr.mxu0 0.0
  %52 = vmatpush1.msra.mxu0 0.0
  %53 = vmatprep.subr.mxu0 0.0
  %54 = vmatpush1.msra.mxu0 0.0
  %55 = vmatprep.subr.mxu0 0.0
  %56 = vmatpush1.msra.mxu0 0.0
  %57 = vmatprep.subr.mxu0 0.0
  %58 = vmatpush1.msra.mxu0 0.0
  %59 = vmatprep.subr.mxu0 0.0
  %60 = vmatpush1.msra.mxu0 0.0
  %61 = vmatprep.subr.mxu0 0.0
  %62 = vmatpush1.msra.mxu0 0.0
  %63 = vmatprep.subr.mxu0 0.0
  %64 = vmatpush1.msra.mxu0 0.0
  %65 = vmatprep.subr.mxu0 0.0
  %66 = vmatpush1.msra.mxu0 0.0
  %67 = vmatprep.subr.mxu0 0.0
  %68 = vmatpush1.msra.mxu0 0.0
  %69 = vmatprep.subr.mxu0 0.0
  %70 = vmatpush1.msra.mxu0 0.0
  %71 = vmatprep.subr.mxu0 0.0
  %72 = vmatpush1.msra.mxu0 0.0
  %73 = vmatprep.subr.mxu0 0.0
  %74 = vmatpush1.msra.mxu0 0.0
  %75 = vmatprep.subr.mxu0 0.0
  %76 = vmatpush1.msra.mxu0 0.0
  %77 = vmatprep.subr.mxu0 0.0
  %78 = vmatpush1.msra.mxu0 0.0
  %79 = vmatprep.subr.mxu0 0.0
  %80 = vmatpush1.msra.mxu0 0.0
  %81 = vmatprep.subr.mxu0 0.0
  %82 = vmatpush1.msra.mxu0 0.0
  %83 = vmatprep.subr.mxu0 0.0
  %84 = vmatpush1.msra.mxu0 0.0
  %85 = vmatprep.subr.mxu0 0.0
  %86 = vmatpush1.msra.mxu0 0.0
  %87 = vmatprep.subr.mxu0 0.0
  %88 = vmatpush1.msra.mxu0 0.0
  %89 = vmatprep.subr.mxu0 0.0
  %90 = vmatpush1.msra.mxu0 0.0
  %91 = vmatprep.subr.mxu0 0.0
  %92 = vmatpush1.msra.mxu0 0.0
  %93 = vmatprep.subr.mxu0 0.0
  %94 = vmatpush1.msra.mxu0 0.0
  %95 = vmatprep.subr.mxu0 0.0
  %96 = vmatpush1.msra.mxu0 0.0
  %97 = vmatprep.subr.mxu0 0.0
  %98 = vmatpush1.msra.mxu0 0.0
  %99 = vmatprep.subr.mxu0 0.0
  %100 = vmatpush1.msra.mxu0 0.0
  %101 = vmatprep.mubr.f32.mxu0 0.0
  %102 = vmatmul.mubr.f32.gmra.mrb[0].mxu0 %v35
  %v103 = vpop.f32.mrb[0].mxu0
  %v104 = vadd.f32 %v31, %v103
  %v105 = vpop.f32.mrb[0].mxu0
  %106 = vdwg.mxu0
  %v107 = vmax.f32 %v104, 0.0
  %v108 = vld [vmem:[%s3] sm:$0xff]
  %v109 = vld [vmem:[%s3 + $0x8] sm:$0xff]
  %v110 = vld [vmem:[%s3 + $0x10] sm:$0xff]
  %v111 = vld [vmem:[%s3 + $0x18] sm:$0xff]
  %v112 = vld [vmem:[%s3 + $0x20] sm:$0xff]
  %v113 = vld [vmem:[%s3 + $0x28] sm:$0xff]
  %v114 = vld [vmem:[%s3 + $0x30] sm:$0xff]
  %v115 = vld [vmem:[%s3 + $0x38] sm:$0xff]
  %s116 = sld [smem:[#allocation2]]
  %v117 = vstv %s116
  %vm118 = vcmask 523264
  %v120 = vsel %vm118, %v107, 0
  %122 = vmatprep.subr.mxu0 0.0
  %123 = vmatpush1.msra.mxu0 %v108
  %124 = vmatprep.subr.mxu0 0.0
  %125 = vmatpush1.msra.mxu0 %v109
  %126 = vmatprep.subr.mxu0 0.0
  %127 = vmatpush1.msra.mxu0 %v110
  %128 = vmatprep.subr.mxu0 0.0
  %129 = vmatpush1.msra.mxu0 %v111
  %130 = vmatprep.subr.mxu0 0.0
  %131 = vmatpush1.msra.mxu0 %v112
  %132 = vmatprep.subr.mxu0 0.0
  %133 = vmatpush1.msra.mxu0 %v113
  %134 = vmatprep.subr.mxu0 0.0
  %135 = vmatpush1.msra.mxu0 %v114
  %136 = vmatprep.subr.mxu0 0.0
  %137 = vmatpush1.msra.mxu0 %v115
  %138 = vmatprep.subr.mxu0 0.0
  %139 = vmatpush1.msra.mxu0 0.0
  %140 = vmatprep.subr.mxu0 0.0
  %141 = vmatpush1.msra.mxu0 0.0
  %142 = vmatprep.subr.mxu0 0.0
  %143 = vmatpush1.msra.mxu0 0.0
  %144 = vmatprep.subr.mxu0 0.0
  %145 = vmatpush1.msra.mxu0 0.0
  %146 = vmatprep.subr.mxu0 0.0
  %147 = vmatpush1.msra.mxu0 0.0
  %148 = vmatprep.subr.mxu0 0.0
  %149 = vmatpush1.msra.mxu0 0.0
  %150 = vmatprep.subr.mxu0 0.0
  %151 = vmatpush1.msra.mxu0 0.0
  %152 = vmatprep.subr.mxu0 0.0
  %153 = vmatpush1.msra.mxu0 0.0
  %154 = vmatprep.subr.mxu0 0.0
  %155 = vmatpush1.msra.mxu0 0.0
  %156 = vmatprep.subr.mxu0 0.0
  %157 = vmatpush1.msra.mxu0 0.0
  %158 = vmatprep.subr.mxu0 0.0
  %159 = vmatpush1.msra.mxu0 0.0
  %160 = vmatprep.subr.mxu0 0.0
  %161 = vmatpush1.msra.mxu0 0.0
  %162 = vmatprep.subr.mxu0 0.0
  %163 = vmatpush1.msra.mxu0 0.0
  %164 = vmatprep.subr.mxu0 0.0
  %165 = vmatpush1.msra.mxu0 0.0
  %166 = vmatprep.subr.mxu0 0.0
  %167 = vmatpush1.msra.mxu0 0.0
  %168 = vmatprep.subr.mxu0 0.0
  %169 = vmatpush1.msra.mxu0 0.0
  %170 = vmatprep.subr.mxu0 0.0
  %171 = vmatpush1.msra.mxu0 0.0
  %172 = vmatprep.subr.mxu0 0.0
  %173 = vmatpush1.msra.mxu0 0.0
  %174 = vmatprep.subr.mxu0 0.0
  %175 = vmatpush1.msra.mxu0 0.0
  %176 = vmatprep.subr.mxu0 0.0
  %177 = vmatpush1.msra.mxu0 0.0
  %178 = vmatprep.subr.mxu0 0.0
  %179 = vmatpush1.msra.mxu0 0.0
  %180 = vmatprep.subr.mxu0 0.0
  %181 = vmatpush1.msra.mxu0 0.0
  %182 = vmatprep.subr.mxu0 0.0
  %183 = vmatpush1.msra.mxu0 0.0
  %184 = vmatprep.subr.mxu0 0.0
  %185 = vmatpush1.msra.mxu0 0.0
  %186 = vmatprep.mubr.f32.mxu0 0.0
  %187 = vmatmul.mubr.f32.gmra.mrb[0].mxu0 %v120
  %v188 = vpop.f32.mrb[0].mxu0
  %v189 = vadd.f32 %v117, %v188
  %v190 = vpop.f32.mrb[0].mxu0
  %191 = vdwg.mxu0
  %v192 = vxor.u32 %v189, 2147483648
  %v193 = vmul.f32 %v192, 1.442695
  %v194 = vpow.pop %v193
  %v195 = vadd.f32 %v194, 1.0
  %v196 = vrcp.pop %v195
  %v197 = vmul.f32 1.0, %v196
  %vm198 = vcmask 7168
  %199 = vst.msk [vmem:[%s5] sm:$0xff] %vm198, %v197
  // Predicated region
  $region22: #{tpu_custom_call.1} parent=0 // pred_check
    _
  $region23: #{tpu_custom_call.1} parent=0 // pred_check_branch
    %201 = sbr.rel (0) target = $region25
  $region24: #{tpu_custom_call.1} parent=0 // pred_region
    _
  $region25: #{tpu_custom_call.1} parent=0 // pred_fallthru
    _
  // Predicated region
  $region26: #{tpu_custom_call.1} parent=0 // pred_check
    _
  $region27: #{tpu_custom_call.1} parent=0 // pred_check_branch
    %203 = sbr.rel (0) target = $region29
  $region28: #{tpu_custom_call.1} parent=0 // pred_region
    _
  $region29: #{tpu_custom_call.1} parent=0 // pred_fallthru
    _

</llo_original>
